<compile_context>
chip_gen: v6e
topology: v6e:2x2x1
jax: 0.10.0
libtpu: 0.0.40
codegen_flags: <defaults>
</compile_context>

<pallas_src>
import functools

import jax
import jax.numpy as jnp
from jax.experimental import pallas as pl
from jax.experimental.pallas import tpu as pltpu


BB = 8  # batch elements per grid block == sublane count (LIF state = one vreg)


def _round_up(x, m):
    return (x + m - 1) // m * m


# ---------------------------------------------------------------------------
# Fused Pallas kernel: all FullColumn layers + inter-layer time pooling.
# ---------------------------------------------------------------------------
def stack_kernel(x_ref, *refs, cfgs, pool_kernel):
    """One batch block (BB elements) of the full stack.

    x_ref:   (T0*BB, N0_pad)      bf16 input spikes, row = t*BB + b
    refs:    w_ref per layer      (N_in_pad, N_out_pad) bf16
             bias_ref             (BB, N_last_pad) f32 teaching potential
             out_ref              (T_last*BB, N_last_pad) f32 output spikes
             scratch_ref          (T_mid*BB, N_mid_pad) bf16 inter-layer spikes
    """
    n_layers = len(cfgs)
    w_refs = refs[:n_layers]
    bias_ref = refs[n_layers]
    out_ref = refs[n_layers + 1]
    scratch_ref = refs[n_layers + 2] if n_layers > 1 else None

    src_ref = x_ref
    for i, cfg in enumerate(cfgs):
        last = i == n_layers - 1
        pool = 1 if last else pool_kernel
        t_in = cfg["t_in"]
        n_in_pad = cfg["n_in_pad"]
        n_out_pad = cfg["n_out_pad"]
        theta = jnp.float32(cfg["theta"])
        decay = jnp.float32(1.0 - 1.0 / cfg["leak"])

        # One lane-dense batched matmul for every (time, batch) row (MXU, bf16
        # inputs, f32 accumulation).
        x_val = src_ref[pl.ds(0, t_in * BB), pl.ds(0, n_in_pad)]
        pot = jnp.dot(x_val, w_refs[i][...], preferred_element_type=jnp.float32)

        # Teaching potential is only applied on the last column.
        # TODO(synk): without the FullColumn source it is unclear whether the
        # supervisory bias is a per-step current (implemented here) or gated.
        bias = bias_ref[...] if last else None  # (BB, n_out_pad) f32

        # Sequential LIF recurrence, batch vectorized on the sublane axis.
        # T is small here so a static unroll is fine; for large T switch to
        # lax.fori_loop(..., unroll=True) carrying `v` with per-step stores.
        t_out = t_in // pool  # floor => trailing steps dropped (max_pool1d)
        v = jnp.zeros((BB, n_out_pad), jnp.float32)
        for t in range(t_out):
            pooled = None
            for j in range(pool):
                tt = t * pool + j
                drive = pot[tt * BB:(tt + 1) * BB, :]  # vreg-aligned 8-row slab
                if last:
                    drive = drive + bias
                v = v * decay + drive
                s = (v >= theta).astype(jnp.float32)
                v = v * (1.0 - s)  # reset membrane on spike
                pooled = s if pooled is None else jnp.maximum(pooled, s)
            # Direct per-step store (fused time max-pool) -- no concatenate.
            if last:
                out_ref[pl.ds(t * BB, BB), :] = pooled
            else:
                scratch_ref[pl.ds(t * BB, BB), pl.ds(0, n_out_pad)] = (
                    pooled.astype(scratch_ref.dtype))
        src_ref = scratch_ref


# ---------------------------------------------------------------------------
# Wrapper: layout plumbing (lane/batch padding, time-major reshapes) + pallas_call.
# ---------------------------------------------------------------------------
def stack_full_column_forward(input_spikes, params, *, kernel=2,
                              labels=None, bias=0.5):
    """input_spikes: (B, C, S, T) -> output spikes (B, C_last, S_last, T_last)."""
    B, C, S, T = input_spikes.shape
    n_layers = len(params)

    # Static per-layer configs (lane padding to multiples of 128).
    cfgs = []
    t_in = T
    for i, p in enumerate(params):
        n_in, n_out = p["weight"].shape
        cfgs.append(dict(
            t_in=t_in, n_in=n_in, n_out=n_out,
            n_in_pad=_round_up(n_in, 128), n_out_pad=_round_up(n_out, 128),
            theta=float(p["theta"]), leak=float(p["leak"]),
        ))
        if i != n_layers - 1:
            t_in = t_in // kernel
    t_last = cfgs[-1]["t_in"]
    n_out_last = cfgs[-1]["n_out"]
    n_out_last_pad = cfgs[-1]["n_out_pad"]
    n0, n0_pad = cfgs[0]["n_in"], cfgs[0]["n_in_pad"]

    # Batch padded to a multiple of BB so each block's LIF state fills a vreg.
    B_pad = _round_up(B, BB)
    n_blocks = B_pad // BB

    # (B, C, S, T) -> (n_blocks, T*BB, N0_pad), time-major within block, bf16.
    x = input_spikes.reshape(B, n0, T).transpose(2, 0, 1).astype(jnp.float32)
    x = jnp.pad(x, ((0, 0), (0, B_pad - B), (0, n0_pad - n0)))
    x = (x.reshape(T, n_blocks, BB, n0_pad)
          .transpose(1, 0, 2, 3)
          .reshape(n_blocks, T * BB, n0_pad)
          .astype(jnp.bfloat16))

    # Zero-padded bf16 weights (padded output columns never fire: 0 < theta).
    w_pads = []
    for p, cfg in zip(params, cfgs):
        w = jnp.pad(p["weight"].astype(jnp.float32),
                    ((0, cfg["n_in_pad"] - cfg["n_in"]),
                     (0, cfg["n_out_pad"] - cfg["n_out"])))
        w_pads.append(w.astype(jnp.bfloat16))

    # Teaching potential for the last column (f32, per batch block).
    if labels is not None:
        teach = bias * cfgs[-1]["theta"] * jax.nn.one_hot(
            labels, n_out_last, dtype=jnp.float32)
    else:
        teach = jnp.zeros((B, n_out_last), jnp.float32)
    teach = jnp.pad(teach, ((0, B_pad - B), (0, n_out_last_pad - n_out_last)))
    teach = teach.reshape(n_blocks, BB, n_out_last_pad)

    # Block specs: one batch block per grid step; weights are shared (block 0).
    in_specs = [pl.BlockSpec((None, T * BB, n0_pad), lambda b: (b, 0, 0))]
    for cfg in cfgs:
        in_specs.append(pl.BlockSpec((cfg["n_in_pad"], cfg["n_out_pad"]),
                                     lambda b: (0, 0)))
    in_specs.append(pl.BlockSpec((None, BB, n_out_last_pad), lambda b: (b, 0, 0)))
    out_specs = pl.BlockSpec((None, t_last * BB, n_out_last_pad),
                             lambda b: (b, 0, 0))
    out_shape = jax.ShapeDtypeStruct((n_blocks, t_last * BB, n_out_last_pad),
                                     jnp.float32)

    # VMEM scratch for inter-layer spikes (whole stack stays on-chip).
    scratch_shapes = []
    if n_layers > 1:
        mid_rows = max(cfg["t_in"] for cfg in cfgs[1:]) * BB
        mid_cols = max(cfg["n_in_pad"] for cfg in cfgs[1:])
        scratch_shapes.append(pltpu.VMEM((mid_rows, mid_cols), jnp.bfloat16))

    kern = functools.partial(stack_kernel, cfgs=cfgs, pool_kernel=kernel)
    out = pl.pallas_call(
        kern,
        out_shape=out_shape,
        grid=(n_blocks,),
        in_specs=in_specs,
        out_specs=out_specs,
        scratch_shapes=scratch_shapes,
        compiler_params=pltpu.CompilerParams(
            dimension_semantics=("parallel",)),  # shards batch blocks on v7x
    )(x, *w_pads, teach)

    # (n_blocks, T_last*BB, N_pad) -> (B, C_out, S_out, T_last)
    c_out, s_out = params[-1]["c_out"], params[-1]["s_out"]
    out = (out.reshape(n_blocks, t_last, BB, n_out_last_pad)
              .transpose(0, 2, 3, 1)
              .reshape(B_pad, n_out_last_pad, t_last)[:B, :n_out_last, :]
              .reshape(B, c_out, s_out, t_last))
    return out


def init_stack_params(key, synapses, channels, w_init=0.0, leak=32):
    """Deterministic synthetic weights + thresholds for each FullColumn."""
    params = []
    num_cols = len(synapses) - 1
    keys = jax.random.split(key, num_cols)
    for i in range(num_cols):
        n_in = channels[i] * synapses[i]
        n_out = channels[i + 1] * synapses[i + 1]
        w = w_init + jax.random.uniform(keys[i], (n_in, n_out), jnp.float32) / n_in
        # TODO(synk): FullColumn derives theta from `dense`; source unavailable,
        # use a density-proportional synthetic threshold.
        theta = 0.05 * n_in
        params.append(dict(weight=w, theta=theta, leak=leak,
                           c_out=channels[i + 1], s_out=synapses[i + 1]))
    return params


# ---------------------------------------------------------------------------
if __name__ == "__main__":
    key = jax.random.PRNGKey(0)
    k_param, k_in = jax.random.split(key)

    synapses = (64, 32, 10)        # 2 stacked FullColumns
    channels = (1, 1, 1)
    kernel = 2
    B, T = 2, 16

    params = init_stack_params(k_param, synapses, channels, w_init=0.0, leak=32)

    # Binary input spikes, PyTorch layout (batch, channel, synapses, time).
    input_spikes = (jax.random.uniform(k_in, (B, channels[0], synapses[0], T))
                    < 0.3).astype(jnp.float32)

    out = stack_full_column_forward(input_spikes, params,
                                    kernel=kernel, labels=None)
    out = jax.block_until_ready(out)

    expected_shape = (B, channels[-1], synapses[-1], T // kernel)
    assert out.shape == expected_shape, (out.shape, expected_shape)
    assert out.dtype == jnp.float32
    print("KERNEL_OK")
</pallas_src>

<mosaic_0001>
module attributes {stable_mosaic.version = 11 : i64} {
  func.func @stack_kernel(%arg0: i32, %arg1: memref<1x128x128xbf16, #tpu.memory_space<vmem>>, %arg2: memref<128x128xbf16, #tpu.memory_space<vmem>>, %arg3: memref<128x128xbf16, #tpu.memory_space<vmem>>, %arg4: memref<1x8x128xf32, #tpu.memory_space<vmem>>, %arg5: memref<1x64x128xf32, #tpu.memory_space<vmem>>, %arg6: memref<64x128xbf16, #tpu.memory_space<vmem>>) attributes {dimension_semantics = [#tpu.dimension_semantics<parallel>], iteration_bounds = array<i64: 1>, scalar_prefetch = 0 : i64, scratch_operands = 1 : i64, tpu.core_type = #tpu.core_type<tc>, window_params = [{transform_indices = @transform_0, window_bounds = array<i64: 1, 128, 128>}, {pipeline_mode = #tpu.pipeline_mode<synchronous>, transform_indices = @transform_1, window_bounds = array<i64: 128, 128>}, {pipeline_mode = #tpu.pipeline_mode<synchronous>, transform_indices = @transform_2, window_bounds = array<i64: 128, 128>}, {transform_indices = @transform_3, window_bounds = array<i64: 1, 8, 128>}, {transform_indices = @transform_4, window_bounds = array<i64: 1, 64, 128>}]} {
    %c0 = arith.constant 0 : index
    %c0_0 = arith.constant 0 : index
    %c0_1 = arith.constant 0 : index
    %0 = vector.load %arg1[%c0, %c0_0, %c0_1] : memref<1x128x128xbf16, #tpu.memory_space<vmem>>, vector<1x128x128xbf16>
    %1 = vector.shape_cast %0 : vector<1x128x128xbf16> to vector<128x128xbf16>
    %c0_2 = arith.constant 0 : index
    %c0_3 = arith.constant 0 : index
    %2 = vector.load %arg2[%c0_2, %c0_3] : memref<128x128xbf16, #tpu.memory_space<vmem>>, vector<128x128xbf16>
    %cst = arith.constant dense<0.000000e+00> : vector<128x128xf32>
    %3 = tpu.matmul %1, %2, %cst {dimension_numbers = #tpu.dot_dimension_numbers<[1], [0], [0], [1], [0, 0, 1, 1], [], []>} : vector<128x128xbf16>, vector<128x128xbf16>, vector<128x128xf32> -> vector<128x128xf32>
    %cst_4 = arith.constant 0.000000e+00 : f32
    %4 = vector.broadcast %cst_4 : f32 to vector<8x128xf32>
    %5 = vector.extract_strided_slice %3 {offsets = [0, 0], sizes = [8, 128], strides = [1, 1]} : vector<128x128xf32> to vector<8x128xf32>
    %cst_5 = arith.constant 9.687500e-01 : f32
    %6 = vector.broadcast %cst_5 : f32 to vector<8x128xf32>
    %7 = arith.mulf %4, %6 : vector<8x128xf32>
    %8 = arith.addf %7, %5 : vector<8x128xf32>
    %cst_6 = arith.constant 3.200000e+00 : f32
    %9 = vector.broadcast %cst_6 : f32 to vector<8x128xf32>
    %10 = arith.cmpf oge, %8, %9 : vector<8x128xf32>
    %11 = arith.extui %10 : vector<8x128xi1> to vector<8x128xi32>
    %12 = arith.sitofp %11 : vector<8x128xi32> to vector<8x128xf32>
    %cst_7 = arith.constant 1.000000e+00 : f32
    %13 = vector.broadcast %cst_7 : f32 to vector<8x128xf32>
    %14 = arith.subf %13, %12 : vector<8x128xf32>
    %15 = arith.mulf %8, %14 : vector<8x128xf32>
    %16 = vector.extract_strided_slice %3 {offsets = [8, 0], sizes = [8, 128], strides = [1, 1]} : vector<128x128xf32> to vector<8x128xf32>
    %cst_8 = arith.constant 9.687500e-01 : f32
    %17 = vector.broadcast %cst_8 : f32 to vector<8x128xf32>
    %18 = arith.mulf %15, %17 : vector<8x128xf32>
    %19 = arith.addf %18, %16 : vector<8x128xf32>
    %cst_9 = arith.constant 3.200000e+00 : f32
    %20 = vector.broadcast %cst_9 : f32 to vector<8x128xf32>
    %21 = arith.cmpf oge, %19, %20 : vector<8x128xf32>
    %22 = arith.extui %21 : vector<8x128xi1> to vector<8x128xi32>
    %23 = arith.sitofp %22 : vector<8x128xi32> to vector<8x128xf32>
    %cst_10 = arith.constant 1.000000e+00 : f32
    %24 = vector.broadcast %cst_10 : f32 to vector<8x128xf32>
    %25 = arith.subf %24, %23 : vector<8x128xf32>
    %26 = arith.mulf %19, %25 : vector<8x128xf32>
    %27 = arith.maximumf %12, %23 : vector<8x128xf32>
    %28 = arith.truncf %27 : vector<8x128xf32> to vector<8x128xbf16>
    %c0_11 = arith.constant 0 : index
    %c0_12 = arith.constant 0 : index
    %29 = vector.load %arg6[%c0_11, %c0_12] : memref<64x128xbf16, #tpu.memory_space<vmem>>, vector<8x128xbf16>
    tpu.vector_store %arg6[%c0_11, %c0_12], %28 {strides = array<i32>} : memref<64x128xbf16, #tpu.memory_space<vmem>>, vector<8x128xbf16>,
    %30 = vector.extract_strided_slice %3 {offsets = [16, 0], sizes = [8, 128], strides = [1, 1]} : vector<128x128xf32> to vector<8x128xf32>
    %cst_13 = arith.constant 9.687500e-01 : f32
    %31 = vector.broadcast %cst_13 : f32 to vector<8x128xf32>
    %32 = arith.mulf %26, %31 : vector<8x128xf32>
    %33 = arith.addf %32, %30 : vector<8x128xf32>
    %cst_14 = arith.constant 3.200000e+00 : f32
    %34 = vector.broadcast %cst_14 : f32 to vector<8x128xf32>
    %35 = arith.cmpf oge, %33, %34 : vector<8x128xf32>
    %36 = arith.extui %35 : vector<8x128xi1> to vector<8x128xi32>
    %37 = arith.sitofp %36 : vector<8x128xi32> to vector<8x128xf32>
    %cst_15 = arith.constant 1.000000e+00 : f32
    %38 = vector.broadcast %cst_15 : f32 to vector<8x128xf32>
    %39 = arith.subf %38, %37 : vector<8x128xf32>
    %40 = arith.mulf %33, %39 : vector<8x128xf32>
    %41 = vector.extract_strided_slice %3 {offsets = [24, 0], sizes = [8, 128], strides = [1, 1]} : vector<128x128xf32> to vector<8x128xf32>
    %cst_16 = arith.constant 9.687500e-01 : f32
    %42 = vector.broadcast %cst_16 : f32 to vector<8x128xf32>
    %43 = arith.mulf %40, %42 : vector<8x128xf32>
    %44 = arith.addf %43, %41 : vector<8x128xf32>
    %cst_17 = arith.constant 3.200000e+00 : f32
    %45 = vector.broadcast %cst_17 : f32 to vector<8x128xf32>
    %46 = arith.cmpf oge, %44, %45 : vector<8x128xf32>
    %47 = arith.extui %46 : vector<8x128xi1> to vector<8x128xi32>
    %48 = arith.sitofp %47 : vector<8x128xi32> to vector<8x128xf32>
    %cst_18 = arith.constant 1.000000e+00 : f32
    %49 = vector.broadcast %cst_18 : f32 to vector<8x128xf32>
    %50 = arith.subf %49, %48 : vector<8x128xf32>
    %51 = arith.mulf %44, %50 : vector<8x128xf32>
    %52 = arith.maximumf %37, %48 : vector<8x128xf32>
    %53 = arith.truncf %52 : vector<8x128xf32> to vector<8x128xbf16>
    %c8 = arith.constant 8 : index
    %c0_19 = arith.constant 0 : index
    %54 = vector.load %arg6[%c8, %c0_19] : memref<64x128xbf16, #tpu.memory_space<vmem>>, vector<8x128xbf16>
    tpu.vector_store %arg6[%c8, %c0_19], %53 {strides = array<i32>} : memref<64x128xbf16, #tpu.memory_space<vmem>>, vector<8x128xbf16>,
    %55 = vector.extract_strided_slice %3 {offsets = [32, 0], sizes = [8, 128], strides = [1, 1]} : vector<128x128xf32> to vector<8x128xf32>
    %cst_20 = arith.constant 9.687500e-01 : f32
    %56 = vector.broadcast %cst_20 : f32 to vector<8x128xf32>
    %57 = arith.mulf %51, %56 : vector<8x128xf32>
    %58 = arith.addf %57, %55 : vector<8x128xf32>
    %cst_21 = arith.constant 3.200000e+00 : f32
    %59 = vector.broadcast %cst_21 : f32 to vector<8x128xf32>
    %60 = arith.cmpf oge, %58, %59 : vector<8x128xf32>
    %61 = arith.extui %60 : vector<8x128xi1> to vector<8x128xi32>
    %62 = arith.sitofp %61 : vector<8x128xi32> to vector<8x128xf32>
    %cst_22 = arith.constant 1.000000e+00 : f32
    %63 = vector.broadcast %cst_22 : f32 to vector<8x128xf32>
    %64 = arith.subf %63, %62 : vector<8x128xf32>
    %65 = arith.mulf %58, %64 : vector<8x128xf32>
    %66 = vector.extract_strided_slice %3 {offsets = [40, 0], sizes = [8, 128], strides = [1, 1]} : vector<128x128xf32> to vector<8x128xf32>
    %cst_23 = arith.constant 9.687500e-01 : f32
    %67 = vector.broadcast %cst_23 : f32 to vector<8x128xf32>
    %68 = arith.mulf %65, %67 : vector<8x128xf32>
    %69 = arith.addf %68, %66 : vector<8x128xf32>
    %cst_24 = arith.constant 3.200000e+00 : f32
    %70 = vector.broadcast %cst_24 : f32 to vector<8x128xf32>
    %71 = arith.cmpf oge, %69, %70 : vector<8x128xf32>
    %72 = arith.extui %71 : vector<8x128xi1> to vector<8x128xi32>
    %73 = arith.sitofp %72 : vector<8x128xi32> to vector<8x128xf32>
    %cst_25 = arith.constant 1.000000e+00 : f32
    %74 = vector.broadcast %cst_25 : f32 to vector<8x128xf32>
    %75 = arith.subf %74, %73 : vector<8x128xf32>
    %76 = arith.mulf %69, %75 : vector<8x128xf32>
    %77 = arith.maximumf %62, %73 : vector<8x128xf32>
    %78 = arith.truncf %77 : vector<8x128xf32> to vector<8x128xbf16>
    %c16 = arith.constant 16 : index
    %c0_26 = arith.constant 0 : index
    %79 = vector.load %arg6[%c16, %c0_26] : memref<64x128xbf16, #tpu.memory_space<vmem>>, vector<8x128xbf16>
    tpu.vector_store %arg6[%c16, %c0_26], %78 {strides = array<i32>} : memref<64x128xbf16, #tpu.memory_space<vmem>>, vector<8x128xbf16>,
    %80 = vector.extract_strided_slice %3 {offsets = [48, 0], sizes = [8, 128], strides = [1, 1]} : vector<128x128xf32> to vector<8x128xf32>
    %cst_27 = arith.constant 9.687500e-01 : f32
    %81 = vector.broadcast %cst_27 : f32 to vector<8x128xf32>
    %82 = arith.mulf %76, %81 : vector<8x128xf32>
    %83 = arith.addf %82, %80 : vector<8x128xf32>
    %cst_28 = arith.constant 3.200000e+00 : f32
    %84 = vector.broadcast %cst_28 : f32 to vector<8x128xf32>
    %85 = arith.cmpf oge, %83, %84 : vector<8x128xf32>
    %86 = arith.extui %85 : vector<8x128xi1> to vector<8x128xi32>
    %87 = arith.sitofp %86 : vector<8x128xi32> to vector<8x128xf32>
    %cst_29 = arith.constant 1.000000e+00 : f32
    %88 = vector.broadcast %cst_29 : f32 to vector<8x128xf32>
    %89 = arith.subf %88, %87 : vector<8x128xf32>
    %90 = arith.mulf %83, %89 : vector<8x128xf32>
    %91 = vector.extract_strided_slice %3 {offsets = [56, 0], sizes = [8, 128], strides = [1, 1]} : vector<128x128xf32> to vector<8x128xf32>
    %cst_30 = arith.constant 9.687500e-01 : f32
    %92 = vector.broadcast %cst_30 : f32 to vector<8x128xf32>
    %93 = arith.mulf %90, %92 : vector<8x128xf32>
    %94 = arith.addf %93, %91 : vector<8x128xf32>
    %cst_31 = arith.constant 3.200000e+00 : f32
    %95 = vector.broadcast %cst_31 : f32 to vector<8x128xf32>
    %96 = arith.cmpf oge, %94, %95 : vector<8x128xf32>
    %97 = arith.extui %96 : vector<8x128xi1> to vector<8x128xi32>
    %98 = arith.sitofp %97 : vector<8x128xi32> to vector<8x128xf32>
    %cst_32 = arith.constant 1.000000e+00 : f32
    %99 = vector.broadcast %cst_32 : f32 to vector<8x128xf32>
    %100 = arith.subf %99, %98 : vector<8x128xf32>
    %101 = arith.mulf %94, %100 : vector<8x128xf32>
    %102 = arith.maximumf %87, %98 : vector<8x128xf32>
    %103 = arith.truncf %102 : vector<8x128xf32> to vector<8x128xbf16>
    %c24 = arith.constant 24 : index
    %c0_33 = arith.constant 0 : index
    %104 = vector.load %arg6[%c24, %c0_33] : memref<64x128xbf16, #tpu.memory_space<vmem>>, vector<8x128xbf16>
    tpu.vector_store %arg6[%c24, %c0_33], %103 {strides = array<i32>} : memref<64x128xbf16, #tpu.memory_space<vmem>>, vector<8x128xbf16>,
    %105 = vector.extract_strided_slice %3 {offsets = [64, 0], sizes = [8, 128], strides = [1, 1]} : vector<128x128xf32> to vector<8x128xf32>
    %cst_34 = arith.constant 9.687500e-01 : f32
    %106 = vector.broadcast %cst_34 : f32 to vector<8x128xf32>
    %107 = arith.mulf %101, %106 : vector<8x128xf32>
    %108 = arith.addf %107, %105 : vector<8x128xf32>
    %cst_35 = arith.constant 3.200000e+00 : f32
    %109 = vector.broadcast %cst_35 : f32 to vector<8x128xf32>
    %110 = arith.cmpf oge, %108, %109 : vector<8x128xf32>
    %111 = arith.extui %110 : vector<8x128xi1> to vector<8x128xi32>
    %112 = arith.sitofp %111 : vector<8x128xi32> to vector<8x128xf32>
    %cst_36 = arith.constant 1.000000e+00 : f32
    %113 = vector.broadcast %cst_36 : f32 to vector<8x128xf32>
    %114 = arith.subf %113, %112 : vector<8x128xf32>
    %115 = arith.mulf %108, %114 : vector<8x128xf32>
    %116 = vector.extract_strided_slice %3 {offsets = [72, 0], sizes = [8, 128], strides = [1, 1]} : vector<128x128xf32> to vector<8x128xf32>
    %cst_37 = arith.constant 9.687500e-01 : f32
    %117 = vector.broadcast %cst_37 : f32 to vector<8x128xf32>
    %118 = arith.mulf %115, %117 : vector<8x128xf32>
    %119 = arith.addf %118, %116 : vector<8x128xf32>
    %cst_38 = arith.constant 3.200000e+00 : f32
    %120 = vector.broadcast %cst_38 : f32 to vector<8x128xf32>
    %121 = arith.cmpf oge, %119, %120 : vector<8x128xf32>
    %122 = arith.extui %121 : vector<8x128xi1> to vector<8x128xi32>
    %123 = arith.sitofp %122 : vector<8x128xi32> to vector<8x128xf32>
    %cst_39 = arith.constant 1.000000e+00 : f32
    %124 = vector.broadcast %cst_39 : f32 to vector<8x128xf32>
    %125 = arith.subf %124, %123 : vector<8x128xf32>
    %126 = arith.mulf %119, %125 : vector<8x128xf32>
    %127 = arith.maximumf %112, %123 : vector<8x128xf32>
    %128 = arith.truncf %127 : vector<8x128xf32> to vector<8x128xbf16>
    %c32 = arith.constant 32 : index
    %c0_40 = arith.constant 0 : index
    %129 = vector.load %arg6[%c32, %c0_40] : memref<64x128xbf16, #tpu.memory_space<vmem>>, vector<8x128xbf16>
    tpu.vector_store %arg6[%c32, %c0_40], %128 {strides = array<i32>} : memref<64x128xbf16, #tpu.memory_space<vmem>>, vector<8x128xbf16>,
    %130 = vector.extract_strided_slice %3 {offsets = [80, 0], sizes = [8, 128], strides = [1, 1]} : vector<128x128xf32> to vector<8x128xf32>
    %cst_41 = arith.constant 9.687500e-01 : f32
    %131 = vector.broadcast %cst_41 : f32 to vector<8x128xf32>
    %132 = arith.mulf %126, %131 : vector<8x128xf32>
    %133 = arith.addf %132, %130 : vector<8x128xf32>
    %cst_42 = arith.constant 3.200000e+00 : f32
    %134 = vector.broadcast %cst_42 : f32 to vector<8x128xf32>
    %135 = arith.cmpf oge, %133, %134 : vector<8x128xf32>
    %136 = arith.extui %135 : vector<8x128xi1> to vector<8x128xi32>
    %137 = arith.sitofp %136 : vector<8x128xi32> to vector<8x128xf32>
    %cst_43 = arith.constant 1.000000e+00 : f32
    %138 = vector.broadcast %cst_43 : f32 to vector<8x128xf32>
    %139 = arith.subf %138, %137 : vector<8x128xf32>
    %140 = arith.mulf %133, %139 : vector<8x128xf32>
    %141 = vector.extract_strided_slice %3 {offsets = [88, 0], sizes = [8, 128], strides = [1, 1]} : vector<128x128xf32> to vector<8x128xf32>
    %cst_44 = arith.constant 9.687500e-01 : f32
    %142 = vector.broadcast %cst_44 : f32 to vector<8x128xf32>
    %143 = arith.mulf %140, %142 : vector<8x128xf32>
    %144 = arith.addf %143, %141 : vector<8x128xf32>
    %cst_45 = arith.constant 3.200000e+00 : f32
    %145 = vector.broadcast %cst_45 : f32 to vector<8x128xf32>
    %146 = arith.cmpf oge, %144, %145 : vector<8x128xf32>
    %147 = arith.extui %146 : vector<8x128xi1> to vector<8x128xi32>
    %148 = arith.sitofp %147 : vector<8x128xi32> to vector<8x128xf32>
    %cst_46 = arith.constant 1.000000e+00 : f32
    %149 = vector.broadcast %cst_46 : f32 to vector<8x128xf32>
    %150 = arith.subf %149, %148 : vector<8x128xf32>
    %151 = arith.mulf %144, %150 : vector<8x128xf32>
    %152 = arith.maximumf %137, %148 : vector<8x128xf32>
    %153 = arith.truncf %152 : vector<8x128xf32> to vector<8x128xbf16>
    %c40 = arith.constant 40 : index
    %c0_47 = arith.constant 0 : index
    %154 = vector.load %arg6[%c40, %c0_47] : memref<64x128xbf16, #tpu.memory_space<vmem>>, vector<8x128xbf16>
    tpu.vector_store %arg6[%c40, %c0_47], %153 {strides = array<i32>} : memref<64x128xbf16, #tpu.memory_space<vmem>>, vector<8x128xbf16>,
    %155 = vector.extract_strided_slice %3 {offsets = [96, 0], sizes = [8, 128], strides = [1, 1]} : vector<128x128xf32> to vector<8x128xf32>
    %cst_48 = arith.constant 9.687500e-01 : f32
    %156 = vector.broadcast %cst_48 : f32 to vector<8x128xf32>
    %157 = arith.mulf %151, %156 : vector<8x128xf32>
    %158 = arith.addf %157, %155 : vector<8x128xf32>
    %cst_49 = arith.constant 3.200000e+00 : f32
    %159 = vector.broadcast %cst_49 : f32 to vector<8x128xf32>
    %160 = arith.cmpf oge, %158, %159 : vector<8x128xf32>
    %161 = arith.extui %160 : vector<8x128xi1> to vector<8x128xi32>
    %162 = arith.sitofp %161 : vector<8x128xi32> to vector<8x128xf32>
    %cst_50 = arith.constant 1.000000e+00 : f32
    %163 = vector.broadcast %cst_50 : f32 to vector<8x128xf32>
    %164 = arith.subf %163, %162 : vector<8x128xf32>
    %165 = arith.mulf %158, %164 : vector<8x128xf32>
    %166 = vector.extract_strided_slice %3 {offsets = [104, 0], sizes = [8, 128], strides = [1, 1]} : vector<128x128xf32> to vector<8x128xf32>
    %cst_51 = arith.constant 9.687500e-01 : f32
    %167 = vector.broadcast %cst_51 : f32 to vector<8x128xf32>
    %168 = arith.mulf %165, %167 : vector<8x128xf32>
    %169 = arith.addf %168, %166 : vector<8x128xf32>
    %cst_52 = arith.constant 3.200000e+00 : f32
    %170 = vector.broadcast %cst_52 : f32 to vector<8x128xf32>
    %171 = arith.cmpf oge, %169, %170 : vector<8x128xf32>
    %172 = arith.extui %171 : vector<8x128xi1> to vector<8x128xi32>
    %173 = arith.sitofp %172 : vector<8x128xi32> to vector<8x128xf32>
    %cst_53 = arith.constant 1.000000e+00 : f32
    %174 = vector.broadcast %cst_53 : f32 to vector<8x128xf32>
    %175 = arith.subf %174, %173 : vector<8x128xf32>
    %176 = arith.mulf %169, %175 : vector<8x128xf32>
    %177 = arith.maximumf %162, %173 : vector<8x128xf32>
    %178 = arith.truncf %177 : vector<8x128xf32> to vector<8x128xbf16>
    %c48 = arith.constant 48 : index
    %c0_54 = arith.constant 0 : index
    %179 = vector.load %arg6[%c48, %c0_54] : memref<64x128xbf16, #tpu.memory_space<vmem>>, vector<8x128xbf16>
    tpu.vector_store %arg6[%c48, %c0_54], %178 {strides = array<i32>} : memref<64x128xbf16, #tpu.memory_space<vmem>>, vector<8x128xbf16>,
    %180 = vector.extract_strided_slice %3 {offsets = [112, 0], sizes = [8, 128], strides = [1, 1]} : vector<128x128xf32> to vector<8x128xf32>
    %cst_55 = arith.constant 9.687500e-01 : f32
    %181 = vector.broadcast %cst_55 : f32 to vector<8x128xf32>
    %182 = arith.mulf %176, %181 : vector<8x128xf32>
    %183 = arith.addf %182, %180 : vector<8x128xf32>
    %cst_56 = arith.constant 3.200000e+00 : f32
    %184 = vector.broadcast %cst_56 : f32 to vector<8x128xf32>
    %185 = arith.cmpf oge, %183, %184 : vector<8x128xf32>
    %186 = arith.extui %185 : vector<8x128xi1> to vector<8x128xi32>
    %187 = arith.sitofp %186 : vector<8x128xi32> to vector<8x128xf32>
    %cst_57 = arith.constant 1.000000e+00 : f32
    %188 = vector.broadcast %cst_57 : f32 to vector<8x128xf32>
    %189 = arith.subf %188, %187 : vector<8x128xf32>
    %190 = arith.mulf %183, %189 : vector<8x128xf32>
    %191 = vector.extract_strided_slice %3 {offsets = [120, 0], sizes = [8, 128], strides = [1, 1]} : vector<128x128xf32> to vector<8x128xf32>
    %cst_58 = arith.constant 9.687500e-01 : f32
    %192 = vector.broadcast %cst_58 : f32 to vector<8x128xf32>
    %193 = arith.mulf %190, %192 : vector<8x128xf32>
    %194 = arith.addf %193, %191 : vector<8x128xf32>
    %cst_59 = arith.constant 3.200000e+00 : f32
    %195 = vector.broadcast %cst_59 : f32 to vector<8x128xf32>
    %196 = arith.cmpf oge, %194, %195 : vector<8x128xf32>
    %197 = arith.extui %196 : vector<8x128xi1> to vector<8x128xi32>
    %198 = arith.sitofp %197 : vector<8x128xi32> to vector<8x128xf32>
    %199 = arith.maximumf %187, %198 : vector<8x128xf32>
    %200 = arith.truncf %199 : vector<8x128xf32> to vector<8x128xbf16>
    %c56 = arith.constant 56 : index
    %c0_60 = arith.constant 0 : index
    %201 = vector.load %arg6[%c56, %c0_60] : memref<64x128xbf16, #tpu.memory_space<vmem>>, vector<8x128xbf16>
    tpu.vector_store %arg6[%c56, %c0_60], %200 {strides = array<i32>} : memref<64x128xbf16, #tpu.memory_space<vmem>>, vector<8x128xbf16>,
    %c0_61 = arith.constant 0 : index
    %c0_62 = arith.constant 0 : index
    %202 = vector.load %arg6[%c0_61, %c0_62] : memref<64x128xbf16, #tpu.memory_space<vmem>>, vector<64x128xbf16>
    %c0_63 = arith.constant 0 : index
    %c0_64 = arith.constant 0 : index
    %203 = vector.load %arg3[%c0_63, %c0_64] : memref<128x128xbf16, #tpu.memory_space<vmem>>, vector<128x128xbf16>
    %cst_65 = arith.constant dense<0.000000e+00> : vector<64x128xf32>
    %204 = tpu.matmul %202, %203, %cst_65 {dimension_numbers = #tpu.dot_dimension_numbers<[1], [0], [0], [1], [0, 0, 1, 1], [], []>} : vector<64x128xbf16>, vector<128x128xbf16>, vector<64x128xf32> -> vector<64x128xf32>
    %c0_66 = arith.constant 0 : index
    %c0_67 = arith.constant 0 : index
    %c0_68 = arith.constant 0 : index
    %205 = vector.load %arg4[%c0_66, %c0_67, %c0_68] : memref<1x8x128xf32, #tpu.memory_space<vmem>>, vector<1x8x128xf32>
    %206 = vector.shape_cast %205 : vector<1x8x128xf32> to vector<8x128xf32>
    %cst_69 = arith.constant 0.000000e+00 : f32
    %207 = vector.broadcast %cst_69 : f32 to vector<8x128xf32>
    %208 = vector.extract_strided_slice %204 {offsets = [0, 0], sizes = [8, 128], strides = [1, 1]} : vector<64x128xf32> to vector<8x128xf32>
    %209 = arith.addf %208, %206 : vector<8x128xf32>
    %cst_70 = arith.constant 9.687500e-01 : f32
    %210 = vector.broadcast %cst_70 : f32 to vector<8x128xf32>
    %211 = arith.mulf %207, %210 : vector<8x128xf32>
    %212 = arith.addf %211, %209 : vector<8x128xf32>
    %cst_71 = arith.constant 1.600000e+00 : f32
    %213 = vector.broadcast %cst_71 : f32 to vector<8x128xf32>
    %214 = arith.cmpf oge, %212, %213 : vector<8x128xf32>
    %215 = arith.extui %214 : vector<8x128xi1> to vector<8x128xi32>
    %216 = arith.sitofp %215 : vector<8x128xi32> to vector<8x128xf32>
    %cst_72 = arith.constant 1.000000e+00 : f32
    %217 = vector.broadcast %cst_72 : f32 to vector<8x128xf32>
    %218 = arith.subf %217, %216 : vector<8x128xf32>
    %219 = arith.mulf %212, %218 : vector<8x128xf32>
    %c0_73 = arith.constant 0 : index
    %c0_74 = arith.constant 0 : index
    %c0_75 = arith.constant 0 : index
    %220 = vector.load %arg5[%c0_73, %c0_74, %c0_75] : memref<1x64x128xf32, #tpu.memory_space<vmem>>, vector<1x8x128xf32>
    %221 = vector.shape_cast %220 : vector<1x8x128xf32> to vector<8x128xf32>
    %222 = vector.shape_cast %216 : vector<8x128xf32> to vector<1x8x128xf32>
    tpu.vector_store %arg5[%c0_73, %c0_74, %c0_75], %222 {strides = array<i32>} : memref<1x64x128xf32, #tpu.memory_space<vmem>>, vector<1x8x128xf32>,
    %223 = vector.extract_strided_slice %204 {offsets = [8, 0], sizes = [8, 128], strides = [1, 1]} : vector<64x128xf32> to vector<8x128xf32>
    %224 = arith.addf %223, %206 : vector<8x128xf32>
    %cst_76 = arith.constant 9.687500e-01 : f32
    %225 = vector.broadcast %cst_76 : f32 to vector<8x128xf32>
    %226 = arith.mulf %219, %225 : vector<8x128xf32>
    %227 = arith.addf %226, %224 : vector<8x128xf32>
    %cst_77 = arith.constant 1.600000e+00 : f32
    %228 = vector.broadcast %cst_77 : f32 to vector<8x128xf32>
    %229 = arith.cmpf oge, %227, %228 : vector<8x128xf32>
    %230 = arith.extui %229 : vector<8x128xi1> to vector<8x128xi32>
    %231 = arith.sitofp %230 : vector<8x128xi32> to vector<8x128xf32>
    %cst_78 = arith.constant 1.000000e+00 : f32
    %232 = vector.broadcast %cst_78 : f32 to vector<8x128xf32>
    %233 = arith.subf %232, %231 : vector<8x128xf32>
    %234 = arith.mulf %227, %233 : vector<8x128xf32>
    %c0_79 = arith.constant 0 : index
    %c8_80 = arith.constant 8 : index
    %c0_81 = arith.constant 0 : index
    %235 = vector.load %arg5[%c0_79, %c8_80, %c0_81] : memref<1x64x128xf32, #tpu.memory_space<vmem>>, vector<1x8x128xf32>
    %236 = vector.shape_cast %235 : vector<1x8x128xf32> to vector<8x128xf32>
    %237 = vector.shape_cast %231 : vector<8x128xf32> to vector<1x8x128xf32>
    tpu.vector_store %arg5[%c0_79, %c8_80, %c0_81], %237 {strides = array<i32>} : memref<1x64x128xf32, #tpu.memory_space<vmem>>, vector<1x8x128xf32>,
    %238 = vector.extract_strided_slice %204 {offsets = [16, 0], sizes = [8, 128], strides = [1, 1]} : vector<64x128xf32> to vector<8x128xf32>
    %239 = arith.addf %238, %206 : vector<8x128xf32>
    %cst_82 = arith.constant 9.687500e-01 : f32
    %240 = vector.broadcast %cst_82 : f32 to vector<8x128xf32>
    %241 = arith.mulf %234, %240 : vector<8x128xf32>
    %242 = arith.addf %241, %239 : vector<8x128xf32>
    %cst_83 = arith.constant 1.600000e+00 : f32
    %243 = vector.broadcast %cst_83 : f32 to vector<8x128xf32>
    %244 = arith.cmpf oge, %242, %243 : vector<8x128xf32>
    %245 = arith.extui %244 : vector<8x128xi1> to vector<8x128xi32>
    %246 = arith.sitofp %245 : vector<8x128xi32> to vector<8x128xf32>
    %cst_84 = arith.constant 1.000000e+00 : f32
    %247 = vector.broadcast %cst_84 : f32 to vector<8x128xf32>
    %248 = arith.subf %247, %246 : vector<8x128xf32>
    %249 = arith.mulf %242, %248 : vector<8x128xf32>
    %c0_85 = arith.constant 0 : index
    %c16_86 = arith.constant 16 : index
    %c0_87 = arith.constant 0 : index
    %250 = vector.load %arg5[%c0_85, %c16_86, %c0_87] : memref<1x64x128xf32, #tpu.memory_space<vmem>>, vector<1x8x128xf32>
    %251 = vector.shape_cast %250 : vector<1x8x128xf32> to vector<8x128xf32>
    %252 = vector.shape_cast %246 : vector<8x128xf32> to vector<1x8x128xf32>
    tpu.vector_store %arg5[%c0_85, %c16_86, %c0_87], %252 {strides = array<i32>} : memref<1x64x128xf32, #tpu.memory_space<vmem>>, vector<1x8x128xf32>,
    %253 = vector.extract_strided_slice %204 {offsets = [24, 0], sizes = [8, 128], strides = [1, 1]} : vector<64x128xf32> to vector<8x128xf32>
    %254 = arith.addf %253, %206 : vector<8x128xf32>
    %cst_88 = arith.constant 9.687500e-01 : f32
    %255 = vector.broadcast %cst_88 : f32 to vector<8x128xf32>
    %256 = arith.mulf %249, %255 : vector<8x128xf32>
    %257 = arith.addf %256, %254 : vector<8x128xf32>
    %cst_89 = arith.constant 1.600000e+00 : f32
    %258 = vector.broadcast %cst_89 : f32 to vector<8x128xf32>
    %259 = arith.cmpf oge, %257, %258 : vector<8x128xf32>
    %260 = arith.extui %259 : vector<8x128xi1> to vector<8x128xi32>
    %261 = arith.sitofp %260 : vector<8x128xi32> to vector<8x128xf32>
    %cst_90 = arith.constant 1.000000e+00 : f32
    %262 = vector.broadcast %cst_90 : f32 to vector<8x128xf32>
    %263 = arith.subf %262, %261 : vector<8x128xf32>
    %264 = arith.mulf %257, %263 : vector<8x128xf32>
    %c0_91 = arith.constant 0 : index
    %c24_92 = arith.constant 24 : index
    %c0_93 = arith.constant 0 : index
    %265 = vector.load %arg5[%c0_91, %c24_92, %c0_93] : memref<1x64x128xf32, #tpu.memory_space<vmem>>, vector<1x8x128xf32>
    %266 = vector.shape_cast %265 : vector<1x8x128xf32> to vector<8x128xf32>
    %267 = vector.shape_cast %261 : vector<8x128xf32> to vector<1x8x128xf32>
    tpu.vector_store %arg5[%c0_91, %c24_92, %c0_93], %267 {strides = array<i32>} : memref<1x64x128xf32, #tpu.memory_space<vmem>>, vector<1x8x128xf32>,
    %268 = vector.extract_strided_slice %204 {offsets = [32, 0], sizes = [8, 128], strides = [1, 1]} : vector<64x128xf32> to vector<8x128xf32>
    %269 = arith.addf %268, %206 : vector<8x128xf32>
    %cst_94 = arith.constant 9.687500e-01 : f32
    %270 = vector.broadcast %cst_94 : f32 to vector<8x128xf32>
    %271 = arith.mulf %264, %270 : vector<8x128xf32>
    %272 = arith.addf %271, %269 : vector<8x128xf32>
    %cst_95 = arith.constant 1.600000e+00 : f32
    %273 = vector.broadcast %cst_95 : f32 to vector<8x128xf32>
    %274 = arith.cmpf oge, %272, %273 : vector<8x128xf32>
    %275 = arith.extui %274 : vector<8x128xi1> to vector<8x128xi32>
    %276 = arith.sitofp %275 : vector<8x128xi32> to vector<8x128xf32>
    %cst_96 = arith.constant 1.000000e+00 : f32
    %277 = vector.broadcast %cst_96 : f32 to vector<8x128xf32>
    %278 = arith.subf %277, %276 : vector<8x128xf32>
    %279 = arith.mulf %272, %278 : vector<8x128xf32>
    %c0_97 = arith.constant 0 : index
    %c32_98 = arith.constant 32 : index
    %c0_99 = arith.constant 0 : index
    %280 = vector.load %arg5[%c0_97, %c32_98, %c0_99] : memref<1x64x128xf32, #tpu.memory_space<vmem>>, vector<1x8x128xf32>
    %281 = vector.shape_cast %280 : vector<1x8x128xf32> to vector<8x128xf32>
    %282 = vector.shape_cast %276 : vector<8x128xf32> to vector<1x8x128xf32>
    tpu.vector_store %arg5[%c0_97, %c32_98, %c0_99], %282 {strides = array<i32>} : memref<1x64x128xf32, #tpu.memory_space<vmem>>, vector<1x8x128xf32>,
    %283 = vector.extract_strided_slice %204 {offsets = [40, 0], sizes = [8, 128], strides = [1, 1]} : vector<64x128xf32> to vector<8x128xf32>
    %284 = arith.addf %283, %206 : vector<8x128xf32>
    %cst_100 = arith.constant 9.687500e-01 : f32
    %285 = vector.broadcast %cst_100 : f32 to vector<8x128xf32>
    %286 = arith.mulf %279, %285 : vector<8x128xf32>
    %287 = arith.addf %286, %284 : vector<8x128xf32>
    %cst_101 = arith.constant 1.600000e+00 : f32
    %288 = vector.broadcast %cst_101 : f32 to vector<8x128xf32>
    %289 = arith.cmpf oge, %287, %288 : vector<8x128xf32>
    %290 = arith.extui %289 : vector<8x128xi1> to vector<8x128xi32>
    %291 = arith.sitofp %290 : vector<8x128xi32> to vector<8x128xf32>
    %cst_102 = arith.constant 1.000000e+00 : f32
    %292 = vector.broadcast %cst_102 : f32 to vector<8x128xf32>
    %293 = arith.subf %292, %291 : vector<8x128xf32>
    %294 = arith.mulf %287, %293 : vector<8x128xf32>
    %c0_103 = arith.constant 0 : index
    %c40_104 = arith.constant 40 : index
    %c0_105 = arith.constant 0 : index
    %295 = vector.load %arg5[%c0_103, %c40_104, %c0_105] : memref<1x64x128xf32, #tpu.memory_space<vmem>>, vector<1x8x128xf32>
    %296 = vector.shape_cast %295 : vector<1x8x128xf32> to vector<8x128xf32>
    %297 = vector.shape_cast %291 : vector<8x128xf32> to vector<1x8x128xf32>
    tpu.vector_store %arg5[%c0_103, %c40_104, %c0_105], %297 {strides = array<i32>} : memref<1x64x128xf32, #tpu.memory_space<vmem>>, vector<1x8x128xf32>,
    %298 = vector.extract_strided_slice %204 {offsets = [48, 0], sizes = [8, 128], strides = [1, 1]} : vector<64x128xf32> to vector<8x128xf32>
    %299 = arith.addf %298, %206 : vector<8x128xf32>
    %cst_106 = arith.constant 9.687500e-01 : f32
    %300 = vector.broadcast %cst_106 : f32 to vector<8x128xf32>
    %301 = arith.mulf %294, %300 : vector<8x128xf32>
    %302 = arith.addf %301, %299 : vector<8x128xf32>
    %cst_107 = arith.constant 1.600000e+00 : f32
    %303 = vector.broadcast %cst_107 : f32 to vector<8x128xf32>
    %304 = arith.cmpf oge, %302, %303 : vector<8x128xf32>
    %305 = arith.extui %304 : vector<8x128xi1> to vector<8x128xi32>
    %306 = arith.sitofp %305 : vector<8x128xi32> to vector<8x128xf32>
    %cst_108 = arith.constant 1.000000e+00 : f32
    %307 = vector.broadcast %cst_108 : f32 to vector<8x128xf32>
    %308 = arith.subf %307, %306 : vector<8x128xf32>
    %309 = arith.mulf %302, %308 : vector<8x128xf32>
    %c0_109 = arith.constant 0 : index
    %c48_110 = arith.constant 48 : index
    %c0_111 = arith.constant 0 : index
    %310 = vector.load %arg5[%c0_109, %c48_110, %c0_111] : memref<1x64x128xf32, #tpu.memory_space<vmem>>, vector<1x8x128xf32>
    %311 = vector.shape_cast %310 : vector<1x8x128xf32> to vector<8x128xf32>
    %312 = vector.shape_cast %306 : vector<8x128xf32> to vector<1x8x128xf32>
    tpu.vector_store %arg5[%c0_109, %c48_110, %c0_111], %312 {strides = array<i32>} : memref<1x64x128xf32, #tpu.memory_space<vmem>>, vector<1x8x128xf32>,
    %313 = vector.extract_strided_slice %204 {offsets = [56, 0], sizes = [8, 128], strides = [1, 1]} : vector<64x128xf32> to vector<8x128xf32>
    %314 = arith.addf %313, %206 : vector<8x128xf32>
    %cst_112 = arith.constant 9.687500e-01 : f32
    %315 = vector.broadcast %cst_112 : f32 to vector<8x128xf32>
    %316 = arith.mulf %309, %315 : vector<8x128xf32>
    %317 = arith.addf %316, %314 : vector<8x128xf32>
    %cst_113 = arith.constant 1.600000e+00 : f32
    %318 = vector.broadcast %cst_113 : f32 to vector<8x128xf32>
    %319 = arith.cmpf oge, %317, %318 : vector<8x128xf32>
    %320 = arith.extui %319 : vector<8x128xi1> to vector<8x128xi32>
    %321 = arith.sitofp %320 : vector<8x128xi32> to vector<8x128xf32>
    %c0_114 = arith.constant 0 : index
    %c56_115 = arith.constant 56 : index
    %c0_116 = arith.constant 0 : index
    %322 = vector.load %arg5[%c0_114, %c56_115, %c0_116] : memref<1x64x128xf32, #tpu.memory_space<vmem>>, vector<1x8x128xf32>
    %323 = vector.shape_cast %322 : vector<1x8x128xf32> to vector<8x128xf32>
    %324 = vector.shape_cast %321 : vector<8x128xf32> to vector<1x8x128xf32>
    tpu.vector_store %arg5[%c0_114, %c56_115, %c0_116], %324 {strides = array<i32>} : memref<1x64x128xf32, #tpu.memory_space<vmem>>, vector<1x8x128xf32>,
    return
  }
  func.func @transform_0(%arg0: i32) -> (i32, i32, i32) {
    %c0_i32 = arith.constant 0 : i32
    %c0_i32_0 = arith.constant 0 : i32
    %c0_i32_1 = arith.constant 0 : i32
    return %arg0, %c0_i32, %c0_i32_0 : i32, i32, i32
  }
  func.func @transform_1(%arg0: i32) -> (i32, i32) {
    %c0_i32 = arith.constant 0 : i32
    %c0_i32_0 = arith.constant 0 : i32
    %c0_i32_1 = arith.constant 0 : i32
    return %c0_i32, %c0_i32_0 : i32, i32
  }
  func.func @transform_2(%arg0: i32) -> (i32, i32) {
    %c0_i32 = arith.constant 0 : i32
    %c0_i32_0 = arith.constant 0 : i32
    %c0_i32_1 = arith.constant 0 : i32
    return %c0_i32, %c0_i32_0 : i32, i32
  }
  func.func @transform_3(%arg0: i32) -> (i32, i32, i32) {
    %c0_i32 = arith.constant 0 : i32
    %c0_i32_0 = arith.constant 0 : i32
    %c0_i32_1 = arith.constant 0 : i32
    return %arg0, %c0_i32, %c0_i32_0 : i32, i32, i32
  }
  func.func @transform_4(%arg0: i32) -> (i32, i32, i32) {
    %c0_i32 = arith.constant 0 : i32
    %c0_i32_0 = arith.constant 0 : i32
    %c0_i32_1 = arith.constant 0 : i32
    return %arg0, %c0_i32, %c0_i32_0 : i32, i32, i32
  }
}

</mosaic_0001>

<llo_original>
// kernel: tpu_custom_call.1
$region0: #{tpu_custom_call.1}
  #allocation0 [shape = 'u32[]', space=smem, size = 0x4, offset = 0x4, fixed_abs, tag = 'smem constant byte address 0x4 - core index']
  #allocation1 [shape = 'u32[144,128]{1,0:T(1,128)}', space=vmem, size = 0x12000, scoped, tag = 'internal scratch']
  #allocation2 [shape = 'bf16[64,128]{1,0:T(8,128)(2,1)}', space=vmem, size = 0x4000, scoped, tag = 'scratch operand']
  %s0 = inlined_call_operand.hbm [shape: bf16[1,128,128], index: 0, kind: input, shape index: {}]
  %s1 = inlined_call_operand.hbm [shape: bf16[128,128], index: 1, kind: input, shape index: {}]
  %s2 = inlined_call_operand.hbm [shape: bf16[128,128], index: 2, kind: input, shape index: {}]
  %s3 = inlined_call_operand.hbm [shape: f32[1,8,128], index: 3, kind: input, shape index: {}]
  %s4 = inlined_call_operand.hbm [shape: f32[1,64,128], index: 4, kind: output, shape index: {}]
  %s5 = sld [smem:[#allocation0]]
  $region42: #{tpu_custom_call.1} parent=0
    _
  %s7 = ssub.s32 1, %s5
  %s8 = scalar_select 0, %s7, %s5
  $region1: #{tpu_custom_call.1} parent=0
    #allocation3 [shape = 'u8[32768]{0}', space=vmem, size = 0x8000, scoped, tag = 'input window, operand 0, single buffered']
    #allocation4 [shape = 's32[1]{0}', space=sflag, size = 0x4, scoped, tag = 'scoped memory for tpu_custom_call.1']
    #allocation5 [shape = 's32[1]{0}', space=sflag, size = 0x4, scoped, tag = 'scoped memory for tpu_custom_call.1']
    #allocation6 [shape = 'u8[32768]{0}', space=vmem, size = 0x8000, scoped, tag = 'input window, operand 1, single buffered']
    #allocation7 [shape = 's32[1]{0}', space=sflag, size = 0x4, scoped, tag = 'scoped memory for tpu_custom_call.1']
    #allocation8 [shape = 'u8[32768]{0}', space=vmem, size = 0x8000, scoped, tag = 'input window, operand 2, single buffered']
    #allocation9 [shape = 'u8[4096]{0}', space=vmem, size = 0x1000, scoped, tag = 'input window, operand 3, single buffered']
    #allocation10 [shape = 's32[1]{0}', space=sflag, size = 0x4, scoped, tag = 'scoped memory for tpu_custom_call.1']
    #allocation11 [shape = 'u8[32768]{0}', space=vmem, size = 0x8000, scoped, tag = 'output window, operand 0, single buffered']
    %9 = vsyncpa [#allocation4], 0
    %10 = vsyncpa [#allocation7], 0
    %11 = vsyncpa [#allocation10], 0
    %12 = vsyncpa [#allocation5], 0
    // Predicated region
    $region2: #{tpu_custom_call.1} parent=1 // pred_check
      _
    $region3: #{tpu_custom_call.1} parent=1 // pred_check_branch
      %14 = sbr.rel (0) target = $region5
    $region4: #{tpu_custom_call.1} parent=1 // pred_region
      %s16 = ssub.s32 1024, 1024
      %17 = vsyncadd [#allocation4], %s16
      %s18 = sshll.u32 [#allocation3], 4
      %s19 = int_to_ptr.vmem [resolvable:$true] %s18
      %24 = dma.hbm_to_vmem [thread:$0]  %s0, 1024, %s19, [#allocation4], 64, 64, 4
    $region5: #{tpu_custom_call.1} parent=1 // pred_fallthru
      _
    // Predicated region
    $region6: #{tpu_custom_call.1} parent=1 // pred_check
      _
    $region7: #{tpu_custom_call.1} parent=1 // pred_check_branch
      %26 = sbr.rel (0) target = $region9
    $region8: #{tpu_custom_call.1} parent=1 // pred_region
      %s28 = ssub.s32 1024, 1024
      %29 = vsyncadd [#allocation7], %s28
      %s30 = sshll.u32 [#allocation6], 4
      %s31 = int_to_ptr.vmem [resolvable:$true] %s30
      %36 = dma.hbm_to_vmem [thread:$0]  %s1, 1024, %s31, [#allocation7], 64, 64, 4
    $region9: #{tpu_custom_call.1} parent=1 // pred_fallthru
      _
    // Predicated region
    $region10: #{tpu_custom_call.1} parent=1 // pred_check
      _
    $region11: #{tpu_custom_call.1} parent=1 // pred_check_branch
      %38 = sbr.rel (0) target = $region13
    $region12: #{tpu_custom_call.1} parent=1 // pred_region
      %s40 = ssub.s32 1024, 1024
      %41 = vsyncadd [#allocation7], %s40
      %s42 = sshll.u32 [#allocation8], 4
      %s43 = int_to_ptr.vmem [resolvable:$true] %s42
      %48 = dma.hbm_to_vmem [thread:$0]  %s2, 1024, %s43, [#allocation7], 64, 64, 4
    $region13: #{tpu_custom_call.1} parent=1 // pred_fallthru
      _
    // Predicated region
    $region14: #{tpu_custom_call.1} parent=1 // pred_check
      _
    $region15: #{tpu_custom_call.1} parent=1 // pred_check_branch
      %50 = sbr.rel (0) target = $region17
    $region16: #{tpu_custom_call.1} parent=1 // pred_region
      %s52 = ssub.s32 128, 128
      %53 = vsyncadd [#allocation10], %s52
      %s55 = sshll.u32 [#allocation9], 4
      %s56 = int_to_ptr.vmem [resolvable:$true] %s55
      %58 = dma.hbm_to_vmem [thread:$0]  %s3, 128, %s56, [#allocation10]
    $region17: #{tpu_custom_call.1} parent=1 // pred_fallthru
      _
    // Predicated region
    $region18: #{tpu_custom_call.1} parent=1 // pred_check
      _
    $region19: #{tpu_custom_call.1} parent=1 // pred_check_branch
      %60 = sbr.rel (0) target = $region21
    $region20: #{tpu_custom_call.1} parent=1 // pred_region
      %61 = dma.done [#allocation4], 1024
    $region21: #{tpu_custom_call.1} parent=1 // pred_fallthru
      _
    // Predicated region
    $region22: #{tpu_custom_call.1} parent=1 // pred_check
      _
    $region23: #{tpu_custom_call.1} parent=1 // pred_check_branch
      %63 = sbr.rel (0) target = $region25
    $region24: #{tpu_custom_call.1} parent=1 // pred_region
      %64 = dma.done [#allocation7], 1024
    $region25: #{tpu_custom_call.1} parent=1 // pred_fallthru
      _
    // Predicated region
    $region26: #{tpu_custom_call.1} parent=1 // pred_check
      _
    $region27: #{tpu_custom_call.1} parent=1 // pred_check_branch
      %66 = sbr.rel (0) target = $region29
    $region28: #{tpu_custom_call.1} parent=1 // pred_region
      %67 = dma.done [#allocation7], 1024
    $region29: #{tpu_custom_call.1} parent=1 // pred_fallthru
      _
    // Predicated region
    $region30: #{tpu_custom_call.1} parent=1 // pred_check
      _
    $region31: #{tpu_custom_call.1} parent=1 // pred_check_branch
      %69 = sbr.rel (0) target = $region33
    $region32: #{tpu_custom_call.1} parent=1 // pred_region
      %70 = dma.done [#allocation10], 128
    $region33: #{tpu_custom_call.1} parent=1 // pred_fallthru
      _
    %v72 = vld [vmem:[#allocation3] sm:$0xf]
    %v73 = vld [vmem:[#allocation3 + $0x4] sm:$0xf]
    %v74 = vld [vmem:[#allocation3 + $0x8] sm:$0xf]
    %v75 = vld [vmem:[#allocation3 + $0xc] sm:$0xf]
    %v76 = vld [vmem:[#allocation3 + $0x10] sm:$0xf]
    %v77 = vld [vmem:[#allocation3 + $0x14] sm:$0xf]
    %v78 = vld [vmem:[#allocation3 + $0x18] sm:$0xf]
    %v79 = vld [vmem:[#allocation3 + $0x1c] sm:$0xf]
    %v80 = vld [vmem:[#allocation3 + $0x20] sm:$0xf]
    %v81 = vld [vmem:[#allocation3 + $0x24] sm:$0xf]
    %v82 = vld [vmem:[#allocation3 + $0x28] sm:$0xf]
    %v83 = vld [vmem:[#allocation3 + $0x2c] sm:$0xf]
    %v84 = vld [vmem:[#allocation3 + $0x30] sm:$0xf]
    %v85 = vld [vmem:[#allocation3 + $0x34] sm:$0xf]
    %v86 = vld [vmem:[#allocation3 + $0x38] sm:$0xf]
    %v87 = vld [vmem:[#allocation3 + $0x3c] sm:$0xf]
    %v88 = vld [vmem:[#allocation6] sm:$0xf]
    %v89 = vld [vmem:[#allocation6 + $0x4] sm:$0xf]
    %v90 = vld [vmem:[#allocation6 + $0x8] sm:$0xf]
    %v91 = vld [vmem:[#allocation6 + $0xc] sm:$0xf]
    %v92 = vld [vmem:[#allocation6 + $0x10] sm:$0xf]
    %v93 = vld [vmem:[#allocation6 + $0x14] sm:$0xf]
    %v94 = vld [vmem:[#allocation6 + $0x18] sm:$0xf]
    %v95 = vld [vmem:[#allocation6 + $0x1c] sm:$0xf]
    %v96 = vld [vmem:[#allocation6 + $0x20] sm:$0xf]
    %v97 = vld [vmem:[#allocation6 + $0x24] sm:$0xf]
    %v98 = vld [vmem:[#allocation6 + $0x28] sm:$0xf]
    %v99 = vld [vmem:[#allocation6 + $0x2c] sm:$0xf]
    %v100 = vld [vmem:[#allocation6 + $0x30] sm:$0xf]
    %v101 = vld [vmem:[#allocation6 + $0x34] sm:$0xf]
    %v102 = vld [vmem:[#allocation6 + $0x38] sm:$0xf]
    %v103 = vld [vmem:[#allocation6 + $0x3c] sm:$0xf]
    %v120 = vunpack.c.l.b16 %v72
    %v121 = vunpack.c.l.b16 %v73
    %v122 = vunpack.c.l.b16 %v74
    %v123 = vunpack.c.l.b16 %v75
    %v124 = vunpack.c.l.b16 %v76
    %v125 = vunpack.c.l.b16 %v77
    %v126 = vunpack.c.l.b16 %v78
    %v127 = vunpack.c.l.b16 %v79
    %v128 = vunpack.c.l.b16 %v80
    %v129 = vunpack.c.l.b16 %v81
    %v130 = vunpack.c.l.b16 %v82
    %v131 = vunpack.c.l.b16 %v83
    %v132 = vunpack.c.l.b16 %v84
    %v133 = vunpack.c.l.b16 %v85
    %v134 = vunpack.c.l.b16 %v86
    %v135 = vunpack.c.l.b16 %v87
    %v136 = vpack.c.b16 %v121, %v120
    %v137 = vpack.c.b16 %v123, %v122
    %v138 = vpack.c.b16 %v125, %v124
    %v139 = vpack.c.b16 %v127, %v126
    %v140 = vpack.c.b16 %v129, %v128
    %v141 = vpack.c.b16 %v131, %v130
    %v142 = vpack.c.b16 %v133, %v132
    %v143 = vpack.c.b16 %v135, %v134
    %v168 = vunpack.c.l.b16 %v88
    %v169 = vunpack.c.l.b16 %v89
    %v170 = vunpack.c.l.b16 %v90
    %v171 = vunpack.c.l.b16 %v91
    %v172 = vunpack.c.l.b16 %v92
    %v173 = vunpack.c.l.b16 %v93
    %v174 = vunpack.c.l.b16 %v94
    %v175 = vunpack.c.l.b16 %v95
    %v176 = vunpack.c.l.b16 %v96
    %v177 = vunpack.c.l.b16 %v97
    %v178 = vunpack.c.l.b16 %v98
    %v179 = vunpack.c.l.b16 %v99
    %v180 = vunpack.c.l.b16 %v100
    %v181 = vunpack.c.l.b16 %v101
    %v182 = vunpack.c.l.b16 %v102
    %v183 = vunpack.c.l.b16 %v103
    %v184 = vpack.c.b16 %v169, %v168
    %v185 = vpack.c.b16 %v171, %v170
    %v186 = vpack.c.b16 %v173, %v172
    %v187 = vpack.c.b16 %v175, %v174
    %v188 = vpack.c.b16 %v177, %v176
    %v189 = vpack.c.b16 %v179, %v178
    %v190 = vpack.c.b16 %v181, %v180
    %v191 = vpack.c.b16 %v183, %v182
    %200 = vmatprep.subr.bf16.mxu0 0
    %201 = vmatpush1.bf16.msra.mxu0 %v191
    %202 = vmatprep.subr.bf16.mxu0 0
    %203 = vmatpush1.bf16.msra.mxu0 %v190
    %204 = vmatprep.subr.bf16.mxu0 0
    %205 = vmatpush1.bf16.msra.mxu0 %v189
    %206 = vmatprep.subr.bf16.mxu0 0
    %207 = vmatpush1.bf16.msra.mxu0 %v188
    %208 = vmatprep.subr.bf16.mxu0 0
    %209 = vmatpush1.bf16.msra.mxu0 %v187
    %210 = vmatprep.subr.bf16.mxu0 0
    %211 = vmatpush1.bf16.msra.mxu0 %v186
    %212 = vmatprep.subr.bf16.mxu0 0
    %213 = vmatpush1.bf16.msra.mxu0 %v185
    %214 = vmatprep.subr.bf16.mxu0 0
    %215 = vmatpush1.bf16.msra.mxu0 %v184
    %216 = vmatprep.subr.bf16.mxu0 0
    %217 = vmatpush2.bf16.msra.mxu0 0
    %218 = vmatprep.subr.bf16.mxu0 0
    %219 = vmatpush2.bf16.msra.mxu0 0
    %220 = vmatprep.subr.bf16.mxu0 0
    %221 = vmatpush2.bf16.msra.mxu0 0
    %222 = vmatprep.subr.bf16.mxu0 0
    %223 = vmatpush2.bf16.msra.mxu0 0
    %224 = vmatprep.subr.bf16.mxu0 0
    %225 = vmatpush2.bf16.msra.mxu0 0
    %226 = vmatprep.subr.bf16.mxu0 0
    %227 = vmatpush2.bf16.msra.mxu0 0
    %228 = vmatprep.subr.bf16.mxu0 0
    %229 = vmatpush2.bf16.msra.mxu0 0
    %230 = vmatprep.subr.bf16.mxu0 0
    %231 = vmatpush2.bf16.msra.mxu0 0
    %232 = vmatprep.mubr.bf16.mxu0 0
    %233 = vmatmul.mubr.bf16.gmra.mxu0 %v136
    %v234 = vpop.f32.mrf.mxu0
    %v235 = vadd.f32 0.0, %v234
    %v236 = vpop.f32.mrf.mxu0
    %v237 = vpop.f32.mrf.mxu0
    %v238 = vadd.f32 0.0, %v237
    %v239 = vpop.f32.mrf.mxu0
    %240 = vmatprep.mubr.bf16.mxu0 0
    %241 = vmatmul.mubr.bf16.gmra.mxu0 %v137
    %v242 = vpop.f32.mrf.mxu0
    %v243 = vadd.f32 0.0, %v242
    %v244 = vpop.f32.mrf.mxu0
    %v245 = vpop.f32.mrf.mxu0
    %v246 = vadd.f32 0.0, %v245
    %v247 = vpop.f32.mrf.mxu0
    %248 = vmatprep.mubr.bf16.mxu0 0
    %249 = vmatmul.mubr.bf16.gmra.mxu0 %v138
    %v250 = vpop.f32.mrf.mxu0
    %v251 = vadd.f32 0.0, %v250
    %v252 = vpop.f32.mrf.mxu0
    %v253 = vpop.f32.mrf.mxu0
    %v254 = vadd.f32 0.0, %v253
    %v255 = vpop.f32.mrf.mxu0
    %256 = vmatprep.mubr.bf16.mxu0 0
    %257 = vmatmul.mubr.bf16.gmra.mxu0 %v139
    %v258 = vpop.f32.mrf.mxu0
    %v259 = vadd.f32 0.0, %v258
    %v260 = vpop.f32.mrf.mxu0
    %v261 = vpop.f32.mrf.mxu0
    %v262 = vadd.f32 0.0, %v261
    %v263 = vpop.f32.mrf.mxu0
    %264 = vmatprep.mubr.bf16.mxu0 0
    %265 = vmatmul.mubr.bf16.gmra.mxu0 %v140
    %v266 = vpop.f32.mrf.mxu0
    %v267 = vadd.f32 0.0, %v266
    %v268 = vpop.f32.mrf.mxu0
    %v269 = vpop.f32.mrf.mxu0
    %v270 = vadd.f32 0.0, %v269
    %v271 = vpop.f32.mrf.mxu0
    %272 = vmatprep.mubr.bf16.mxu0 0
    %273 = vmatmul.mubr.bf16.gmra.mxu0 %v141
    %v274 = vpop.f32.mrf.mxu0
    %v275 = vadd.f32 0.0, %v274
    %v276 = vpop.f32.mrf.mxu0
    %v277 = vpop.f32.mrf.mxu0
    %v278 = vadd.f32 0.0, %v277
    %v279 = vpop.f32.mrf.mxu0
    %280 = vmatprep.mubr.bf16.mxu0 0
    %281 = vmatmul.mubr.bf16.gmra.mxu0 %v142
    %v282 = vpop.f32.mrf.mxu0
    %v283 = vadd.f32 0.0, %v282
    %v284 = vpop.f32.mrf.mxu0
    %v285 = vpop.f32.mrf.mxu0
    %v286 = vadd.f32 0.0, %v285
    %v287 = vpop.f32.mrf.mxu0
    %288 = vmatprep.mubr.bf16.mxu0 0
    %289 = vmatmul.mubr.bf16.gmra.mxu0 %v143
    %v290 = vpop.f32.mrf.mxu0
    %v291 = vadd.f32 0.0, %v290
    %v292 = vpop.f32.mrf.mxu0
    %v293 = vpop.f32.mrf.mxu0
    %v294 = vadd.f32 0.0, %v293
    %v295 = vpop.f32.mrf.mxu0
    %296 = vdwg.mxu0
    %v297 = vadd.f32 %v235, 0.0
    %vm298 = vcmp.ge.f32.partialorder %v297, 3.2
    %v299 = vsel %vm298, 1, 0
    %v300 = vcvt.s32.f32 %v299
    %v301 = vsub.f32 1.0, %v300
    %v302 = vmul.f32 %v297, %v301
    %v303 = vmul.f32 %v302, 0.96875
    %v304 = vadd.f32 %v303, %v238
    %vm305 = vcmp.ge.f32.partialorder %v304, 3.2
    %v306 = vsel %vm305, 1, 0
    %v307 = vcvt.s32.f32 %v306
    %v308 = vsub.f32 1.0, %v307
    %v309 = vmul.f32 %v304, %v308
    %v310 = vmax.f32 %v300, %v307
    %v311 = vpack.c.bf16 %v310, %v310
    %312 = vst [vmem:[#allocation2] sm:$0xf] %v311
    %v313 = vmul.f32 %v309, 0.96875
    %v314 = vadd.f32 %v313, %v243
    %vm315 = vcmp.ge.f32.partialorder %v314, 3.2
    %v316 = vsel %vm315, 1, 0
    %v317 = vcvt.s32.f32 %v316
    %v318 = vsub.f32 1.0, %v317
    %v319 = vmul.f32 %v314, %v318
    %v320 = vmul.f32 %v319, 0.96875
    %v321 = vadd.f32 %v320, %v246
    %vm322 = vcmp.ge.f32.partialorder %v321, 3.2
    %v323 = vsel %vm322, 1, 0
    %v324 = vcvt.s32.f32 %v323
    %v325 = vsub.f32 1.0, %v324
    %v326 = vmul.f32 %v321, %v325
    %v327 = vmax.f32 %v317, %v324
    %v328 = vpack.c.bf16 %v327, %v327
    %329 = vst [vmem:[#allocation2 + $0x4] sm:$0xf] %v328
    %v330 = vmul.f32 %v326, 0.96875
    %v331 = vadd.f32 %v330, %v251
    %vm332 = vcmp.ge.f32.partialorder %v331, 3.2
    %v333 = vsel %vm332, 1, 0
    %v334 = vcvt.s32.f32 %v333
    %v335 = vsub.f32 1.0, %v334
    %v336 = vmul.f32 %v331, %v335
    %v337 = vmul.f32 %v336, 0.96875
    %v338 = vadd.f32 %v337, %v254
    %vm339 = vcmp.ge.f32.partialorder %v338, 3.2
    %v340 = vsel %vm339, 1, 0
    %v341 = vcvt.s32.f32 %v340
    %v342 = vsub.f32 1.0, %v341
    %v343 = vmul.f32 %v338, %v342
    %v344 = vmax.f32 %v334, %v341
    %v345 = vpack.c.bf16 %v344, %v344
    %346 = vst [vmem:[#allocation2 + $0x8] sm:$0xf] %v345
    %v347 = vmul.f32 %v343, 0.96875
    %v348 = vadd.f32 %v347, %v259
    %vm349 = vcmp.ge.f32.partialorder %v348, 3.2
    %v350 = vsel %vm349, 1, 0
    %v351 = vcvt.s32.f32 %v350
    %v352 = vsub.f32 1.0, %v351
    %v353 = vmul.f32 %v348, %v352
    %v354 = vmul.f32 %v353, 0.96875
    %v355 = vadd.f32 %v354, %v262
    %vm356 = vcmp.ge.f32.partialorder %v355, 3.2
    %v357 = vsel %vm356, 1, 0
    %v358 = vcvt.s32.f32 %v357
    %v359 = vsub.f32 1.0, %v358
    %v360 = vmul.f32 %v355, %v359
    %v361 = vmax.f32 %v351, %v358
    %v362 = vpack.c.bf16 %v361, %v361
    %363 = vst [vmem:[#allocation2 + $0xc] sm:$0xf] %v362
    %v364 = vmul.f32 %v360, 0.96875
    %v365 = vadd.f32 %v364, %v267
    %vm366 = vcmp.ge.f32.partialorder %v365, 3.2
    %v367 = vsel %vm366, 1, 0
    %v368 = vcvt.s32.f32 %v367
    %v369 = vsub.f32 1.0, %v368
    %v370 = vmul.f32 %v365, %v369
    %v371 = vmul.f32 %v370, 0.96875
    %v372 = vadd.f32 %v371, %v270
    %vm373 = vcmp.ge.f32.partialorder %v372, 3.2
    %v374 = vsel %vm373, 1, 0
    %v375 = vcvt.s32.f32 %v374
    %v376 = vsub.f32 1.0, %v375
    %v377 = vmul.f32 %v372, %v376
    %v378 = vmax.f32 %v368, %v375
    %v379 = vpack.c.bf16 %v378, %v378
    %380 = vst [vmem:[#allocation2 + $0x10] sm:$0xf] %v379
    %v381 = vmul.f32 %v377, 0.96875
    %v382 = vadd.f32 %v381, %v275
    %vm383 = vcmp.ge.f32.partialorder %v382, 3.2
    %v384 = vsel %vm383, 1, 0
    %v385 = vcvt.s32.f32 %v384
    %v386 = vsub.f32 1.0, %v385
    %v387 = vmul.f32 %v382, %v386
    %v388 = vmul.f32 %v387, 0.96875
    %v389 = vadd.f32 %v388, %v278
    %vm390 = vcmp.ge.f32.partialorder %v389, 3.2
    %v391 = vsel %vm390, 1, 0
    %v392 = vcvt.s32.f32 %v391
    %v393 = vsub.f32 1.0, %v392
    %v394 = vmul.f32 %v389, %v393
    %v395 = vmax.f32 %v385, %v392
    %v396 = vpack.c.bf16 %v395, %v395
    %397 = vst [vmem:[#allocation2 + $0x14] sm:$0xf] %v396
    %v398 = vmul.f32 %v394, 0.96875
    %v399 = vadd.f32 %v398, %v283
    %vm400 = vcmp.ge.f32.partialorder %v399, 3.2
    %v401 = vsel %vm400, 1, 0
    %v402 = vcvt.s32.f32 %v401
    %v403 = vsub.f32 1.0, %v402
    %v404 = vmul.f32 %v399, %v403
    %v405 = vmul.f32 %v404, 0.96875
    %v406 = vadd.f32 %v405, %v286
    %vm407 = vcmp.ge.f32.partialorder %v406, 3.2
    %v408 = vsel %vm407, 1, 0
    %v409 = vcvt.s32.f32 %v408
    %v410 = vsub.f32 1.0, %v409
    %v411 = vmul.f32 %v406, %v410
    %v412 = vmax.f32 %v402, %v409
    %v413 = vpack.c.bf16 %v412, %v412
    %414 = vst [vmem:[#allocation2 + $0x18] sm:$0xf] %v413
    %v415 = vmul.f32 %v411, 0.96875
    %v416 = vadd.f32 %v415, %v291
    %vm417 = vcmp.ge.f32.partialorder %v416, 3.2
    %v418 = vsel %vm417, 1, 0
    %v419 = vcvt.s32.f32 %v418
    %v420 = vsub.f32 1.0, %v419
    %v421 = vmul.f32 %v416, %v420
    %v422 = vmul.f32 %v421, 0.96875
    %v423 = vadd.f32 %v422, %v294
    %vm424 = vcmp.ge.f32.partialorder %v423, 3.2
    %v425 = vsel %vm424, 1, 0
    %v426 = vcvt.s32.f32 %v425
    %v427 = vmax.f32 %v419, %v426
    %v428 = vpack.c.bf16 %v427, %v427
    %429 = vst [vmem:[#allocation2 + $0x1c] sm:$0xf] %v428
    %v430 = vld [vmem:[#allocation2] sm:$0xf]
    %v431 = vld [vmem:[#allocation2 + $0x4] sm:$0xf]
    %v432 = vld [vmem:[#allocation2 + $0x8] sm:$0xf]
    %v433 = vld [vmem:[#allocation2 + $0xc] sm:$0xf]
    %v434 = vld [vmem:[#allocation2 + $0x10] sm:$0xf]
    %v435 = vld [vmem:[#allocation2 + $0x14] sm:$0xf]
    %v436 = vld [vmem:[#allocation2 + $0x18] sm:$0xf]
    %v437 = vld [vmem:[#allocation2 + $0x1c] sm:$0xf]
    %v438 = vld [vmem:[#allocation8] sm:$0xf]
    %v439 = vld [vmem:[#allocation8 + $0x4] sm:$0xf]
    %v440 = vld [vmem:[#allocation8 + $0x8] sm:$0xf]
    %v441 = vld [vmem:[#allocation8 + $0xc] sm:$0xf]
    %v442 = vld [vmem:[#allocation8 + $0x10] sm:$0xf]
    %v443 = vld [vmem:[#allocation8 + $0x14] sm:$0xf]
    %v444 = vld [vmem:[#allocation8 + $0x18] sm:$0xf]
    %v445 = vld [vmem:[#allocation8 + $0x1c] sm:$0xf]
    %v446 = vld [vmem:[#allocation8 + $0x20] sm:$0xf]
    %v447 = vld [vmem:[#allocation8 + $0x24] sm:$0xf]
    %v448 = vld [vmem:[#allocation8 + $0x28] sm:$0xf]
    %v449 = vld [vmem:[#allocation8 + $0x2c] sm:$0xf]
    %v450 = vld [vmem:[#allocation8 + $0x30] sm:$0xf]
    %v451 = vld [vmem:[#allocation8 + $0x34] sm:$0xf]
    %v452 = vld [vmem:[#allocation8 + $0x38] sm:$0xf]
    %v453 = vld [vmem:[#allocation8 + $0x3c] sm:$0xf]
    %v462 = vunpack.c.l.b16 %v430
    %v463 = vunpack.c.l.b16 %v431
    %v464 = vunpack.c.l.b16 %v432
    %v465 = vunpack.c.l.b16 %v433
    %v466 = vunpack.c.l.b16 %v434
    %v467 = vunpack.c.l.b16 %v435
    %v468 = vunpack.c.l.b16 %v436
    %v469 = vunpack.c.l.b16 %v437
    %v470 = vpack.c.b16 %v463, %v462
    %v471 = vpack.c.b16 %v465, %v464
    %v472 = vpack.c.b16 %v467, %v466
    %v473 = vpack.c.b16 %v469, %v468
    %v494 = vunpack.c.l.b16 %v438
    %v495 = vunpack.c.l.b16 %v439
    %v496 = vunpack.c.l.b16 %v440
    %v497 = vunpack.c.l.b16 %v441
    %v498 = vunpack.c.l.b16 %v442
    %v499 = vunpack.c.l.b16 %v443
    %v500 = vunpack.c.l.b16 %v444
    %v501 = vunpack.c.l.b16 %v445
    %v502 = vunpack.c.l.b16 %v446
    %v503 = vunpack.c.l.b16 %v447
    %v504 = vunpack.c.l.b16 %v448
    %v505 = vunpack.c.l.b16 %v449
    %v506 = vunpack.c.l.b16 %v450
    %v507 = vunpack.c.l.b16 %v451
    %v508 = vunpack.c.l.b16 %v452
    %v509 = vunpack.c.l.b16 %v453
    %v510 = vpack.c.b16 %v495, %v494
    %v511 = vpack.c.b16 %v497, %v496
    %v512 = vpack.c.b16 %v499, %v498
    %v513 = vpack.c.b16 %v501, %v500
    %v514 = vpack.c.b16 %v503, %v502
    %v515 = vpack.c.b16 %v505, %v504
    %v516 = vpack.c.b16 %v507, %v506
    %v517 = vpack.c.b16 %v509, %v508
    %526 = vmatprep.subr.bf16.mxu0 0
    %527 = vmatpush1.bf16.msra.mxu0 %v517
    %528 = vmatprep.subr.bf16.mxu0 0
    %529 = vmatpush1.bf16.msra.mxu0 %v516
    %530 = vmatprep.subr.bf16.mxu0 0
    %531 = vmatpush1.bf16.msra.mxu0 %v515
    %532 = vmatprep.subr.bf16.mxu0 0
    %533 = vmatpush1.bf16.msra.mxu0 %v514
    %534 = vmatprep.subr.bf16.mxu0 0
    %535 = vmatpush1.bf16.msra.mxu0 %v513
    %536 = vmatprep.subr.bf16.mxu0 0
    %537 = vmatpush1.bf16.msra.mxu0 %v512
    %538 = vmatprep.subr.bf16.mxu0 0
    %539 = vmatpush1.bf16.msra.mxu0 %v511
    %540 = vmatprep.subr.bf16.mxu0 0
    %541 = vmatpush1.bf16.msra.mxu0 %v510
    %542 = vmatprep.subr.bf16.mxu0 0
    %543 = vmatpush2.bf16.msra.mxu0 0
    %544 = vmatprep.subr.bf16.mxu0 0
    %545 = vmatpush2.bf16.msra.mxu0 0
    %546 = vmatprep.subr.bf16.mxu0 0
    %547 = vmatpush2.bf16.msra.mxu0 0
    %548 = vmatprep.subr.bf16.mxu0 0
    %549 = vmatpush2.bf16.msra.mxu0 0
    %550 = vmatprep.subr.bf16.mxu0 0
    %551 = vmatpush2.bf16.msra.mxu0 0
    %552 = vmatprep.subr.bf16.mxu0 0
    %553 = vmatpush2.bf16.msra.mxu0 0
    %554 = vmatprep.subr.bf16.mxu0 0
    %555 = vmatpush2.bf16.msra.mxu0 0
    %556 = vmatprep.subr.bf16.mxu0 0
    %557 = vmatpush2.bf16.msra.mxu0 0
    %558 = vmatprep.mubr.bf16.mxu0 0
    %559 = vmatmul.mubr.bf16.gmra.mxu0 %v470
    %v560 = vpop.f32.mrf.mxu0
    %v561 = vadd.f32 0.0, %v560
    %v562 = vpop.f32.mrf.mxu0
    %v563 = vpop.f32.mrf.mxu0
    %v564 = vadd.f32 0.0, %v563
    %v565 = vpop.f32.mrf.mxu0
    %566 = vmatprep.mubr.bf16.mxu0 0
    %567 = vmatmul.mubr.bf16.gmra.mxu0 %v471
    %v568 = vpop.f32.mrf.mxu0
    %v569 = vadd.f32 0.0, %v568
    %v570 = vpop.f32.mrf.mxu0
    %v571 = vpop.f32.mrf.mxu0
    %v572 = vadd.f32 0.0, %v571
    %v573 = vpop.f32.mrf.mxu0
    %574 = vmatprep.mubr.bf16.mxu0 0
    %575 = vmatmul.mubr.bf16.gmra.mxu0 %v472
    %v576 = vpop.f32.mrf.mxu0
    %v577 = vadd.f32 0.0, %v576
    %v578 = vpop.f32.mrf.mxu0
    %v579 = vpop.f32.mrf.mxu0
    %v580 = vadd.f32 0.0, %v579
    %v581 = vpop.f32.mrf.mxu0
    %582 = vmatprep.mubr.bf16.mxu0 0
    %583 = vmatmul.mubr.bf16.gmra.mxu0 %v473
    %v584 = vpop.f32.mrf.mxu0
    %v585 = vadd.f32 0.0, %v584
    %v586 = vpop.f32.mrf.mxu0
    %v587 = vpop.f32.mrf.mxu0
    %v588 = vadd.f32 0.0, %v587
    %v589 = vpop.f32.mrf.mxu0
    %590 = vdwg.mxu0
    %v591 = vld [vmem:[#allocation9] sm:$0xff]
    %v592 = vadd.f32 %v561, %v591
    %v593 = vadd.f32 %v592, 0.0
    %vm594 = vcmp.ge.f32.partialorder %v593, 1.6
    %v595 = vsel %vm594, 1, 0
    %v596 = vcvt.s32.f32 %v595
    %v597 = vsub.f32 1.0, %v596
    %v598 = vmul.f32 %v593, %v597
    %599 = vst [vmem:[#allocation11] sm:$0xff] %v596
    %v600 = vadd.f32 %v564, %v591
    %v601 = vmul.f32 %v598, 0.96875
    %v602 = vadd.f32 %v601, %v600
    %vm603 = vcmp.ge.f32.partialorder %v602, 1.6
    %v604 = vsel %vm603, 1, 0
    %v605 = vcvt.s32.f32 %v604
    %v606 = vsub.f32 1.0, %v605
    %v607 = vmul.f32 %v602, %v606
    %608 = vst [vmem:[#allocation11 + $0x8] sm:$0xff] %v605
    %v609 = vadd.f32 %v569, %v591
    %v610 = vmul.f32 %v607, 0.96875
    %v611 = vadd.f32 %v610, %v609
    %vm612 = vcmp.ge.f32.partialorder %v611, 1.6
    %v613 = vsel %vm612, 1, 0
    %v614 = vcvt.s32.f32 %v613
    %v615 = vsub.f32 1.0, %v614
    %v616 = vmul.f32 %v611, %v615
    %617 = vst [vmem:[#allocation11 + $0x10] sm:$0xff] %v614
    %v618 = vadd.f32 %v572, %v591
    %v619 = vmul.f32 %v616, 0.96875
    %v620 = vadd.f32 %v619, %v618
    %vm621 = vcmp.ge.f32.partialorder %v620, 1.6
    %v622 = vsel %vm621, 1, 0
    %v623 = vcvt.s32.f32 %v622
    %v624 = vsub.f32 1.0, %v623
    %v625 = vmul.f32 %v620, %v624
    %626 = vst [vmem:[#allocation11 + $0x18] sm:$0xff] %v623
    %v627 = vadd.f32 %v577, %v591
    %v628 = vmul.f32 %v625, 0.96875
    %v629 = vadd.f32 %v628, %v627
    %vm630 = vcmp.ge.f32.partialorder %v629, 1.6
    %v631 = vsel %vm630, 1, 0
    %v632 = vcvt.s32.f32 %v631
    %v633 = vsub.f32 1.0, %v632
    %v634 = vmul.f32 %v629, %v633
    %635 = vst [vmem:[#allocation11 + $0x20] sm:$0xff] %v632
    %v636 = vadd.f32 %v580, %v591
    %v637 = vmul.f32 %v634, 0.96875
    %v638 = vadd.f32 %v637, %v636
    %vm639 = vcmp.ge.f32.partialorder %v638, 1.6
    %v640 = vsel %vm639, 1, 0
    %v641 = vcvt.s32.f32 %v640
    %v642 = vsub.f32 1.0, %v641
    %v643 = vmul.f32 %v638, %v642
    %644 = vst [vmem:[#allocation11 + $0x28] sm:$0xff] %v641
    %v645 = vadd.f32 %v585, %v591
    %v646 = vmul.f32 %v643, 0.96875
    %v647 = vadd.f32 %v646, %v645
    %vm648 = vcmp.ge.f32.partialorder %v647, 1.6
    %v649 = vsel %vm648, 1, 0
    %v650 = vcvt.s32.f32 %v649
    %v651 = vsub.f32 1.0, %v650
    %v652 = vmul.f32 %v647, %v651
    %653 = vst [vmem:[#allocation11 + $0x30] sm:$0xff] %v650
    %v654 = vadd.f32 %v588, %v591
    %v655 = vmul.f32 %v652, 0.96875
    %v656 = vadd.f32 %v655, %v654
    %vm657 = vcmp.ge.f32.partialorder %v656, 1.6
    %v658 = vsel %vm657, 1, 0
    %v659 = vcvt.s32.f32 %v658
    %660 = vst [vmem:[#allocation11 + $0x38] sm:$0xff] %v659
    // Predicated region
    $region34: #{tpu_custom_call.1} parent=1 // pred_check
      _
    $region35: #{tpu_custom_call.1} parent=1 // pred_check_branch
      %662 = sbr.rel (0) target = $region37
    $region36: #{tpu_custom_call.1} parent=1 // pred_region
      %s664 = ssub.s32 1024, 1024
      %665 = vsyncadd [#allocation5], %s664
      %s666 = sshll.u32 [#allocation11], 4
      %s667 = int_to_ptr.vmem [resolvable:$true] %s666
      %672 = dma.vmem_to_hbm [thread:$0]  %s667, 1024, %s4, [#allocation5], 128, 128, 8
    $region37: #{tpu_custom_call.1} parent=1 // pred_fallthru
      _
    // Predicated region
    $region38: #{tpu_custom_call.1} parent=1 // pred_check
      _
    $region39: #{tpu_custom_call.1} parent=1 // pred_check_branch
      %674 = sbr.rel (0) target = $region41
    $region40: #{tpu_custom_call.1} parent=1 // pred_region
      %675 = dma.done [#allocation5], 1024
    $region41: #{tpu_custom_call.1} parent=1 // pred_fallthru
      _
    %676 = vsyncpa [#allocation4], 1
    %677 = vsyncpa [#allocation7], 1
    %678 = vsyncpa [#allocation10], 1
    %679 = vsyncpa [#allocation5], 1

</llo_original>
